<compile_context>
chip_gen: v7x
topology: tpu7x:2x2x1
jax: 0.10.0
libtpu: 0.0.40
codegen_flags: <defaults>
</compile_context>

<pallas_src>
import functools

import jax
import jax.numpy as jnp
from jax.experimental import pallas as pl
from jax.experimental.pallas import tpu as pltpu

NEG_SLOPE = 0.2  # torch_geometric GATConv default negative_slope


# ----------------------------------------------------------------------------
# Fused per-block kernel: G graphs per grid step.
#   feature GAT + ReLU -> per-graph transpose -> temporal GCN + ReLU
# ----------------------------------------------------------------------------
def stgat_fused_kernel(data_ref, adj_ref, ahat_ref,
                       gat_w_ref, asrc_ref, adst_ref, gat_b_ref,
                       gcn_w_ref, gcn_b_ref, o_ref,
                       xstack_ref, zstack_ref, *, G, W, F):
    """One block of G graphs per grid step.

    data:  (G, W, F) f32       raw windows (time-major) of the G graphs
    adj:   (1, G*F, G*F) bf16  block-diagonal feature adjacency (self loops incl.)
    ahat:  (1, G*W, G*W) f32   block-diagonal D^-1/2 (A + I) D^-1/2 over time nodes
    gat_w: (W, W) bf16   asrc/adst/gat_b: (1, W) f32
    gcn_w: (F, F) bf16   gcn_b: (1, F) f32
    out:   (G, W, F) f32  rows = time-step nodes, lanes = feature channels
    xstack:(G*F, W) f32 VMEM scratch (stacked GAT nodes; reused to stage f_out)
    zstack:(G*W, F) f32 VMEM scratch (stacked GCN nodes; reused to stage output)
    """
    # ---- stack the G graphs' feature-node rows: (G*F, W) --------------------
    # Per-graph 2D transposes, statically unrolled, assembled in VMEM scratch.
    # TODO(synk): at production (128-aligned) tile sizes, replace the unrolled
    # per-graph transposes with a single lane-dense batched relayout (einshape).
    for g in range(G):
        xstack_ref[g * F:(g + 1) * F, :] = data_ref[g].T
    x = xstack_ref[...]                                                    # (G*F, W) f32

    # ---- feature GAT over all G graphs at once -------------------------------
    h = jnp.dot(x.astype(jnp.bfloat16), gat_w_ref[...],
                preferred_element_type=jnp.float32)                       # (G*F, W) f32
    h_bf = h.astype(jnp.bfloat16)                                          # cast once

    # Attention logits (both from the same f32 h). Source logit produced directly
    # as a row via an A @ B^T dot_general (no (N,1)->(1,N) transpose).
    a_dst = jnp.sum(h * adst_ref[...], axis=-1, keepdims=True)            # (G*F, 1)
    a_src = jax.lax.dot_general(asrc_ref[...], h,
                                (((1,), (1,)), ((), ())),
                                preferred_element_type=jnp.float32)       # (1, G*F)

    e = a_dst + a_src                                                     # (G*F, G*F)
    e = jnp.where(e > 0, e, NEG_SLOPE * e)                                # LeakyReLU
    # Block-diagonal mask: cross-graph & non-edge entries -> -1e30 so exp underflows
    # to exactly 0. Safe because every row keeps its self-loop entry.
    e = jnp.where(adj_ref[0] > 0, e, jnp.float32(-1e30))

    m = jnp.max(e, axis=-1, keepdims=True)
    p = jnp.exp(e - m)
    inv = pl.reciprocal(jnp.sum(p, axis=-1, keepdims=True), approx=True)  # EUP slot

    agg = jnp.dot(p.astype(jnp.bfloat16), h_bf,
                  preferred_element_type=jnp.float32)                     # (G*F, W)
    f_out = jnp.maximum(agg * inv + gat_b_ref[...], 0.0)                  # GAT + ReLU

    # ---- per-graph transpose back to time-major, stacked: (G*W, F) ------------
    xstack_ref[...] = f_out                          # stage f_out (reuse scratch)
    for g in range(G):
        zstack_ref[g * W:(g + 1) * W, :] = xstack_ref[g * F:(g + 1) * F, :].T
    z = zstack_ref[...]                                                    # (G*W, F) f32

    # ---- temporal GCN over all G graphs at once -------------------------------
    h2 = jnp.dot(z.astype(jnp.bfloat16), gcn_w_ref[...],
                 preferred_element_type=jnp.float32)                      # (G*W, F)
    agg2 = jnp.dot(ahat_ref[0], h2, preferred_element_type=jnp.float32)   # f32 block-diag
    zstack_ref[...] = jnp.maximum(agg2 + gcn_b_ref[...], 0.0)             # GCN + ReLU

    for g in range(G):
        o_ref[g] = zstack_ref[g * W:(g + 1) * W, :]


def choose_graphs_per_block(batch, window, n_features, target_rows=256):
    """Largest divisor G of batch with both stacked node dims <= target_rows.

    target_rows=256 targets a v6e/v7x MXU pass (use 128 on v5e). At the toy sizes
    in __main__ this simply returns batch.
    """
    best = 1
    for g in range(1, batch + 1):
        if batch % g == 0 and g * max(window, n_features) <= target_rows:
            best = g
    return best


def stgat_fused(data, adj_bd, ahat_bd, gat_w, gat_asrc, gat_adst, gat_b,
                gcn_w, gcn_b, *, graphs_per_block):
    batch, win, nfeat = data.shape
    G = graphs_per_block
    assert batch % G == 0
    nblk = batch // G
    # TODO(synk): at production sizes pad window / n_features up to 128 so stores are
    # lane-dense (unmasked vst) and consider pipeline_mode=pl.Buffered(3) on the
    # per-block streams if the profile shows exposed DMA.
    kernel = functools.partial(stgat_fused_kernel, G=G, W=win, F=nfeat)
    grid_spec = pltpu.PrefetchScalarGridSpec(
        num_scalar_prefetch=0,
        grid=(nblk,),
        in_specs=[
            pl.BlockSpec((G, win, nfeat), lambda b: (b, 0, 0)),            # data
            pl.BlockSpec((1, G * nfeat, G * nfeat), lambda b: (b, 0, 0)),  # GAT adj
            pl.BlockSpec((1, G * win, G * win), lambda b: (b, 0, 0)),      # GCN Ahat
            pl.BlockSpec((win, win), lambda b: (0, 0)),                    # gat_w (resident)
            pl.BlockSpec((1, win), lambda b: (0, 0)),                      # att_src
            pl.BlockSpec((1, win), lambda b: (0, 0)),                      # att_dst
            pl.BlockSpec((1, win), lambda b: (0, 0)),                      # gat_b
            pl.BlockSpec((nfeat, nfeat), lambda b: (0, 0)),                # gcn_w (resident)
            pl.BlockSpec((1, nfeat), lambda b: (0, 0)),                    # gcn_b
        ],
        out_specs=pl.BlockSpec((G, win, nfeat), lambda b: (b, 0, 0)),
        scratch_shapes=[
            pltpu.VMEM((G * nfeat, win), jnp.float32),   # xstack / f_out staging
            pltpu.VMEM((G * win, nfeat), jnp.float32),   # zstack / output staging
        ],
    )
    return pl.pallas_call(
        kernel,
        out_shape=jax.ShapeDtypeStruct((batch, win, nfeat), jnp.float32),
        grid_spec=grid_spec,
        compiler_params=pltpu.CompilerParams(
            dimension_semantics=("parallel",),   # v7x: graph-blocks across the 2 TCs
            vmem_limit_bytes=32 * 1024 * 1024,   # blocks are small; v7x (64 MiB) safe
        ),
    )(data, adj_bd, ahat_bd, gat_w, gat_asrc, gat_adst, gat_b, gcn_w, gcn_b)


# ----------------------------------------------------------------------------
# One-time (hoisted) preprocessing: edge_index -> block-diagonal adjacency tiles
# ----------------------------------------------------------------------------
def batched_dense_adjacency(edge_index, batch, nodes_per_graph):
    """Per-graph dense adjacency from a block-diagonal batched edge_index."""
    src, dst = edge_index[0], edge_index[1]
    bsrc = src // nodes_per_graph
    bdst = dst // nodes_per_graph
    b = jnp.where(bsrc == bdst, bdst, batch)           # cross-graph edges dropped
    a = jnp.zeros((batch, nodes_per_graph, nodes_per_graph), jnp.float32)
    return a.at[b, dst % nodes_per_graph, src % nodes_per_graph].set(1.0, mode="drop")


def _block_diagonal(per_graph, graphs_per_block):
    """(B, N, N) per-graph blocks -> (B/G, G*N, G*N) block-diagonal tiles."""
    batch, n, _ = per_graph.shape
    G = graphs_per_block
    nblk = batch // G
    blocks = per_graph.reshape(nblk, G, n, n)
    out = jnp.zeros((nblk, G * n, G * n), per_graph.dtype)
    for g in range(G):
        out = out.at[:, g * n:(g + 1) * n, g * n:(g + 1) * n].set(blocks[:, g])
    return out


def precompute_graph(fc_edge_index, tc_edge_index, batch, n_features, window_size,
                     graphs_per_block):
    # GAT: adjacency mask with self loops (GATConv add_self_loops=True).
    adj_fc = jnp.maximum(batched_dense_adjacency(fc_edge_index, batch, n_features),
                         jnp.eye(n_features, dtype=jnp.float32))
    # GCN: symmetric normalization D^-1/2 (A + I) D^-1/2, per graph.
    a_tc = jnp.maximum(batched_dense_adjacency(tc_edge_index, batch, window_size),
                       jnp.eye(window_size, dtype=jnp.float32))
    deg = jnp.sum(a_tc, axis=-1)
    dinv = 1.0 / jnp.sqrt(jnp.maximum(deg, 1e-12))
    ahat_tc = a_tc * dinv[:, :, None] * dinv[:, None, :]
    return dict(
        # 0/1 mask -> bf16 halves its DMA bytes; Ahat kept f32 (accuracy, per review)
        adj_bd=_block_diagonal(adj_fc, graphs_per_block).astype(jnp.bfloat16),
        ahat_bd=_block_diagonal(ahat_tc, graphs_per_block).astype(jnp.float32),
    )


def fully_connected_edge_index(nodes_per_graph, batch):
    src, dst = [], []
    for b in range(batch):
        off = b * nodes_per_graph
        for i in range(nodes_per_graph):
            for j in range(nodes_per_graph):
                if i != j:
                    src.append(off + j)
                    dst.append(off + i)
    return jnp.array([src, dst], dtype=jnp.int32)


# ----------------------------------------------------------------------------
# Parameters
# ----------------------------------------------------------------------------
def init_params(key, n_features, window_size):
    k = jax.random.split(key, 6)
    s = 0.1
    return dict(
        # feature GATConv(window_size -> window_size)
        gat_w=s * jax.random.normal(k[0], (window_size, window_size), jnp.float32),
        gat_att_src=s * jax.random.normal(k[1], (1, window_size), jnp.float32),
        gat_att_dst=s * jax.random.normal(k[2], (1, window_size), jnp.float32),
        gat_b=s * jax.random.normal(k[3], (1, window_size), jnp.float32),
        # temporal GCNConv(n_features -> n_features)
        gcn_w=s * jax.random.normal(k[4], (n_features, n_features), jnp.float32),
        gcn_b=s * jax.random.normal(k[5], (1, n_features), jnp.float32),
    )
    # NOTE: self.temporal_gat_layers, self.dropout, self.alpha, self.embed_dim are
    # unused in the reference forward pass, so they are not materialized.


def prepare_params(params):
    """Hoisted one-time casts: MXU matmul operands in bf16 (f32 accumulation)."""
    return dict(
        gat_w=params["gat_w"].astype(jnp.bfloat16),
        gat_att_src=params["gat_att_src"],   # f32: logits computed from f32 h
        gat_att_dst=params["gat_att_dst"],
        gat_b=params["gat_b"],
        gcn_w=params["gcn_w"].astype(jnp.bfloat16),
        gcn_b=params["gcn_b"],
    )


# ----------------------------------------------------------------------------
# StgatBlock forward
# ----------------------------------------------------------------------------
@functools.partial(jax.jit, static_argnames=("graphs_per_block",))
def stgat_block_forward(prepared_params, graph, data, graphs_per_block):
    batch, window, n_features = data.shape
    t = stgat_fused(data, graph["adj_bd"], graph["ahat_bd"],
                    prepared_params["gat_w"], prepared_params["gat_att_src"],
                    prepared_params["gat_att_dst"], prepared_params["gat_b"],
                    prepared_params["gcn_w"], prepared_params["gcn_b"],
                    graphs_per_block=graphs_per_block)                    # (B, W, F)
    # Exact PyTorch semantics: t_out.view(B, node_num=n_features, -1).permute(0, 2, 1)
    # TODO(synk): folding this view/permute in-kernel needs a non-tile-aligned minor
    # reshape of the (W, F) tile; kept as a cheap wrapper op for lowering robustness.
    return jnp.transpose(t.reshape(batch, n_features, window), (0, 2, 1))


# ----------------------------------------------------------------------------
# Pure-JAX f32 reference (dense batched form) for correctness checking.
# ----------------------------------------------------------------------------
def _reference_forward(params, data, fc_edge_index, tc_edge_index):
    B, W, F = data.shape
    x = jnp.transpose(data, (0, 2, 1)).reshape(B * F, W)
    M = B * F
    adj = jnp.zeros((M, M), jnp.float32).at[fc_edge_index[1], fc_edge_index[0]].set(1.0)
    adj = jnp.maximum(adj, jnp.eye(M, dtype=jnp.float32))
    h = x @ params["gat_w"]
    a_src = jnp.sum(h * params["gat_att_src"], -1)
    a_dst = jnp.sum(h * params["gat_att_dst"], -1)
    e = a_dst[:, None] + a_src[None, :]
    e = jnp.where(e > 0, e, NEG_SLOPE * e)
    e = jnp.where(adj > 0, e, -jnp.inf)
    attn = jax.nn.softmax(e, axis=-1)
    f_out = jax.nn.relu(attn @ h + params["gat_b"])
    z = jnp.transpose(f_out.reshape(B, F, W), (0, 2, 1)).reshape(B * W, F)
    Mt = B * W
    a2 = jnp.zeros((Mt, Mt), jnp.float32).at[tc_edge_index[1], tc_edge_index[0]].set(1.0)
    a2 = jnp.maximum(a2, jnp.eye(Mt, dtype=jnp.float32))
    dinv = 1.0 / jnp.sqrt(jnp.maximum(a2.sum(1), 1e-12))
    ahat = a2 * dinv[:, None] * dinv[None, :]
    t = jax.nn.relu(ahat @ (z @ params["gcn_w"]) + params["gcn_b"])
    return jnp.transpose(t.reshape(B, F, W), (0, 2, 1))


if __name__ == "__main__":
    batch, window_size, n_features = 2, 8, 4

    key = jax.random.PRNGKey(0)
    k_data, k_param = jax.random.split(key)

    data = jax.random.normal(k_data, (batch, window_size, n_features), jnp.float32)
    params = init_params(k_param, n_features, window_size)

    # Batched fully-connected graphs (feature graph and temporal graph), as the
    # original STGAT pipeline builds them with get_batch_edge_index.
    fc_edge_index = fully_connected_edge_index(n_features, batch)
    tc_edge_index = fully_connected_edge_index(window_size, batch)

    # Graphs per grid step, plus hoisted static preprocessing (done once).
    G = choose_graphs_per_block(batch, window_size, n_features)
    graph = precompute_graph(fc_edge_index, tc_edge_index, batch,
                             n_features, window_size, G)
    prepared = prepare_params(params)

    out = jax.block_until_ready(
        stgat_block_forward(prepared, graph, data, graphs_per_block=G))

    assert out.shape == (batch, window_size, n_features)
    assert bool(jnp.all(jnp.isfinite(out)))

    # bf16-MXU / f32-accumulate kernel vs. pure-f32 dense reference.
    ref = _reference_forward(params, data, fc_edge_index, tc_edge_index)
    assert bool(jnp.allclose(out, ref, rtol=3e-2, atol=3e-2)), \
        float(jnp.max(jnp.abs(out - ref)))

    print("KERNEL_OK")
</pallas_src>

<mosaic_0001>
module attributes {stable_mosaic.version = 11 : i64} {
  func.func @stgat_fused_kernel(%arg0: i32, %arg1: memref<2x8x4xf32, #tpu.memory_space<vmem>>, %arg2: memref<1x8x8xbf16, #tpu.memory_space<vmem>>, %arg3: memref<1x16x16xf32, #tpu.memory_space<vmem>>, %arg4: memref<8x8xbf16, #tpu.memory_space<vmem>>, %arg5: memref<1x8xf32, #tpu.memory_space<vmem>>, %arg6: memref<1x8xf32, #tpu.memory_space<vmem>>, %arg7: memref<1x8xf32, #tpu.memory_space<vmem>>, %arg8: memref<4x4xbf16, #tpu.memory_space<vmem>>, %arg9: memref<1x4xf32, #tpu.memory_space<vmem>>, %arg10: memref<2x8x4xf32, #tpu.memory_space<vmem>>, %arg11: memref<8x8xf32, #tpu.memory_space<vmem>>, %arg12: memref<16x4xf32, #tpu.memory_space<vmem>>) attributes {dimension_semantics = [#tpu.dimension_semantics<parallel>], iteration_bounds = array<i64: 1>, scalar_prefetch = 0 : i64, scratch_operands = 2 : i64, tpu.core_type = #tpu.core_type<tc>, window_params = [{transform_indices = @transform_0, window_bounds = array<i64: 2, 8, 4>}, {transform_indices = @transform_1, window_bounds = array<i64: 1, 8, 8>}, {transform_indices = @transform_2, window_bounds = array<i64: 1, 16, 16>}, {pipeline_mode = #tpu.pipeline_mode<synchronous>, transform_indices = @transform_3, window_bounds = array<i64: 8, 8>}, {pipeline_mode = #tpu.pipeline_mode<synchronous>, transform_indices = @transform_4, window_bounds = array<i64: 1, 8>}, {pipeline_mode = #tpu.pipeline_mode<synchronous>, transform_indices = @transform_5, window_bounds = array<i64: 1, 8>}, {pipeline_mode = #tpu.pipeline_mode<synchronous>, transform_indices = @transform_6, window_bounds = array<i64: 1, 8>}, {pipeline_mode = #tpu.pipeline_mode<synchronous>, transform_indices = @transform_7, window_bounds = array<i64: 4, 4>}, {pipeline_mode = #tpu.pipeline_mode<synchronous>, transform_indices = @transform_8, window_bounds = array<i64: 1, 4>}, {transform_indices = @transform_9, window_bounds = array<i64: 2, 8, 4>}]} {
    %c0 = arith.constant 0 : index
    %c0_0 = arith.constant 0 : index
    %c0_1 = arith.constant 0 : index
    %0 = vector.load %arg1[%c0, %c0_0, %c0_1] : memref<2x8x4xf32, #tpu.memory_space<vmem>>, vector<1x8x4xf32>
    %1 = vector.shape_cast %0 : vector<1x8x4xf32> to vector<8x4xf32>
    %2 = tpu.transpose %1, [1, 0] : vector<8x4xf32> -> vector<4x8xf32>
    %c0_2 = arith.constant 0 : index
    %c0_3 = arith.constant 0 : index
    %3 = vector.load %arg11[%c0_2, %c0_3] : memref<8x8xf32, #tpu.memory_space<vmem>>, vector<4x8xf32>
    tpu.vector_store %arg11[%c0_2, %c0_3], %2 {strides = array<i32>} : memref<8x8xf32, #tpu.memory_space<vmem>>, vector<4x8xf32>,
    %c1 = arith.constant 1 : index
    %c0_4 = arith.constant 0 : index
    %c0_5 = arith.constant 0 : index
    %4 = vector.load %arg1[%c1, %c0_4, %c0_5] : memref<2x8x4xf32, #tpu.memory_space<vmem>>, vector<1x8x4xf32>
    %5 = vector.shape_cast %4 : vector<1x8x4xf32> to vector<8x4xf32>
    %6 = tpu.transpose %5, [1, 0] : vector<8x4xf32> -> vector<4x8xf32>
    %c4 = arith.constant 4 : index
    %c0_6 = arith.constant 0 : index
    %7 = vector.load %arg11[%c4, %c0_6] : memref<8x8xf32, #tpu.memory_space<vmem>>, vector<4x8xf32>
    tpu.vector_store %arg11[%c4, %c0_6], %6 {strides = array<i32>} : memref<8x8xf32, #tpu.memory_space<vmem>>, vector<4x8xf32>,
    %c0_7 = arith.constant 0 : index
    %c0_8 = arith.constant 0 : index
    %8 = vector.load %arg11[%c0_7, %c0_8] : memref<8x8xf32, #tpu.memory_space<vmem>>, vector<8x8xf32>
    %9 = arith.truncf %8 : vector<8x8xf32> to vector<8x8xbf16>
    %c0_9 = arith.constant 0 : index
    %c0_10 = arith.constant 0 : index
    %10 = vector.load %arg4[%c0_9, %c0_10] : memref<8x8xbf16, #tpu.memory_space<vmem>>, vector<8x8xbf16>
    %cst = arith.constant dense<0.000000e+00> : vector<8x8xf32>
    %11 = tpu.matmul %9, %10, %cst {dimension_numbers = #tpu.dot_dimension_numbers<[1], [0], [0], [1], [0, 0, 1, 1], [], []>} : vector<8x8xbf16>, vector<8x8xbf16>, vector<8x8xf32> -> vector<8x8xf32>
    %12 = arith.truncf %11 : vector<8x8xf32> to vector<8x8xbf16>
    %c0_11 = arith.constant 0 : index
    %c0_12 = arith.constant 0 : index
    %13 = vector.load %arg6[%c0_11, %c0_12] : memref<1x8xf32, #tpu.memory_space<vmem>>, vector<1x8xf32>
    %14 = vector.broadcast %13 : vector<1x8xf32> to vector<8x8xf32>
    %15 = arith.mulf %11, %14 : vector<8x8xf32>
    %cst_13 = arith.constant dense<0.000000e+00> : vector<8xf32>
    %16 = vector.multi_reduction <add>, %15, %cst_13 [1] : vector<8x8xf32> to vector<8xf32>
    %17 = vector.shape_cast %16 : vector<8xf32> to vector<8x1xf32>
    %c0_14 = arith.constant 0 : index
    %c0_15 = arith.constant 0 : index
    %18 = vector.load %arg5[%c0_14, %c0_15] : memref<1x8xf32, #tpu.memory_space<vmem>>, vector<1x8xf32>
    %cst_16 = arith.constant dense<0.000000e+00> : vector<1x8xf32>
    %19 = tpu.matmul %18, %11, %cst_16 {dimension_numbers = #tpu.dot_dimension_numbers<[1], [1], [0], [0], [0, 0, 1, 0], [], []>} : vector<1x8xf32>, vector<8x8xf32>, vector<1x8xf32> -> vector<1x8xf32>
    %20 = vector.broadcast %17 : vector<8x1xf32> to vector<8x8xf32>
    %21 = vector.broadcast %19 : vector<1x8xf32> to vector<8x8xf32>
    %22 = arith.addf %20, %21 : vector<8x8xf32>
    %cst_17 = arith.constant 0.000000e+00 : f32
    %23 = vector.broadcast %cst_17 : f32 to vector<8x8xf32>
    %24 = arith.cmpf ogt, %22, %23 : vector<8x8xf32>
    %cst_18 = arith.constant 2.000000e-01 : f32
    %25 = vector.broadcast %cst_18 : f32 to vector<8x8xf32>
    %26 = arith.mulf %25, %22 : vector<8x8xf32>
    %27 = arith.select %24, %22, %26 : vector<8x8xi1>, vector<8x8xf32>
    %c0_19 = arith.constant 0 : index
    %c0_20 = arith.constant 0 : index
    %c0_21 = arith.constant 0 : index
    %28 = vector.load %arg2[%c0_19, %c0_20, %c0_21] : memref<1x8x8xbf16, #tpu.memory_space<vmem>>, vector<1x8x8xbf16>
    %29 = vector.shape_cast %28 : vector<1x8x8xbf16> to vector<8x8xbf16>
    %cst_22 = arith.constant 0.000000e+00 : bf16
    %30 = vector.broadcast %cst_22 : bf16 to vector<8x8xbf16>
    %31 = arith.cmpf ogt, %29, %30 : vector<8x8xbf16>
    %cst_23 = arith.constant -1.000000e+30 : f32
    %32 = vector.broadcast %cst_23 : f32 to vector<8x8xf32>
    %33 = arith.select %31, %27, %32 : vector<8x8xi1>, vector<8x8xf32>
    %cst_24 = arith.constant dense<0xFF800000> : vector<8xf32>
    %34 = vector.multi_reduction <maximumf>, %33, %cst_24 [1] : vector<8x8xf32> to vector<8xf32>
    %35 = vector.shape_cast %34 : vector<8xf32> to vector<8x1xf32>
    %36 = vector.broadcast %35 : vector<8x1xf32> to vector<8x8xf32>
    %37 = arith.subf %33, %36 : vector<8x8xf32>
    %38 = math.exp %37 : vector<8x8xf32>
    %cst_25 = arith.constant dense<0.000000e+00> : vector<8xf32>
    %39 = vector.multi_reduction <add>, %38, %cst_25 [1] : vector<8x8xf32> to vector<8xf32>
    %40 = vector.shape_cast %39 : vector<8xf32> to vector<8x1xf32>
    %41 = tpu.reciprocal %40 {approx = true} : vector<8x1xf32> -> vector<8x1xf32>
    %42 = arith.truncf %38 : vector<8x8xf32> to vector<8x8xbf16>
    %cst_26 = arith.constant dense<0.000000e+00> : vector<8x8xf32>
    %43 = tpu.matmul %42, %12, %cst_26 {dimension_numbers = #tpu.dot_dimension_numbers<[1], [0], [0], [1], [0, 0, 1, 1], [], []>} : vector<8x8xbf16>, vector<8x8xbf16>, vector<8x8xf32> -> vector<8x8xf32>
    %44 = vector.broadcast %41 : vector<8x1xf32> to vector<8x8xf32>
    %45 = arith.mulf %43, %44 : vector<8x8xf32>
    %c0_27 = arith.constant 0 : index
    %c0_28 = arith.constant 0 : index
    %46 = vector.load %arg7[%c0_27, %c0_28] : memref<1x8xf32, #tpu.memory_space<vmem>>, vector<1x8xf32>
    %47 = vector.broadcast %46 : vector<1x8xf32> to vector<8x8xf32>
    %48 = arith.addf %45, %47 : vector<8x8xf32>
    %cst_29 = arith.constant 0.000000e+00 : f32
    %49 = vector.broadcast %cst_29 : f32 to vector<8x8xf32>
    %50 = arith.maximumf %48, %49 : vector<8x8xf32>
    %c0_30 = arith.constant 0 : index
    %c0_31 = arith.constant 0 : index
    %51 = vector.load %arg11[%c0_30, %c0_31] : memref<8x8xf32, #tpu.memory_space<vmem>>, vector<8x8xf32>
    tpu.vector_store %arg11[%c0_30, %c0_31], %50 {strides = array<i32>} : memref<8x8xf32, #tpu.memory_space<vmem>>, vector<8x8xf32>,
    %c0_32 = arith.constant 0 : index
    %c0_33 = arith.constant 0 : index
    %52 = vector.load %arg11[%c0_32, %c0_33] : memref<8x8xf32, #tpu.memory_space<vmem>>, vector<4x8xf32>
    %53 = tpu.transpose %52, [1, 0] : vector<4x8xf32> -> vector<8x4xf32>
    %c0_34 = arith.constant 0 : index
    %c0_35 = arith.constant 0 : index
    %54 = vector.load %arg12[%c0_34, %c0_35] : memref<16x4xf32, #tpu.memory_space<vmem>>, vector<8x4xf32>
    tpu.vector_store %arg12[%c0_34, %c0_35], %53 {strides = array<i32>} : memref<16x4xf32, #tpu.memory_space<vmem>>, vector<8x4xf32>,
    %c4_36 = arith.constant 4 : index
    %c0_37 = arith.constant 0 : index
    %55 = vector.load %arg11[%c4_36, %c0_37] : memref<8x8xf32, #tpu.memory_space<vmem>>, vector<4x8xf32>
    %56 = tpu.transpose %55, [1, 0] : vector<4x8xf32> -> vector<8x4xf32>
    %c8 = arith.constant 8 : index
    %c0_38 = arith.constant 0 : index
    %57 = vector.load %arg12[%c8, %c0_38] : memref<16x4xf32, #tpu.memory_space<vmem>>, vector<8x4xf32>
    tpu.vector_store %arg12[%c8, %c0_38], %56 {strides = array<i32>} : memref<16x4xf32, #tpu.memory_space<vmem>>, vector<8x4xf32>,
    %c0_39 = arith.constant 0 : index
    %c0_40 = arith.constant 0 : index
    %58 = vector.load %arg12[%c0_39, %c0_40] : memref<16x4xf32, #tpu.memory_space<vmem>>, vector<16x4xf32>
    %59 = arith.truncf %58 : vector<16x4xf32> to vector<16x4xbf16>
    %c0_41 = arith.constant 0 : index
    %c0_42 = arith.constant 0 : index
    %60 = vector.load %arg8[%c0_41, %c0_42] : memref<4x4xbf16, #tpu.memory_space<vmem>>, vector<4x4xbf16>
    %cst_43 = arith.constant dense<0.000000e+00> : vector<16x4xf32>
    %61 = tpu.matmul %59, %60, %cst_43 {dimension_numbers = #tpu.dot_dimension_numbers<[1], [0], [0], [1], [0, 0, 1, 1], [], []>} : vector<16x4xbf16>, vector<4x4xbf16>, vector<16x4xf32> -> vector<16x4xf32>
    %c0_44 = arith.constant 0 : index
    %c0_45 = arith.constant 0 : index
    %c0_46 = arith.constant 0 : index
    %62 = vector.load %arg3[%c0_44, %c0_45, %c0_46] : memref<1x16x16xf32, #tpu.memory_space<vmem>>, vector<1x16x16xf32>
    %63 = vector.shape_cast %62 : vector<1x16x16xf32> to vector<16x16xf32>
    %cst_47 = arith.constant dense<0.000000e+00> : vector<16x4xf32>
    %64 = tpu.matmul %63, %61, %cst_47 {dimension_numbers = #tpu.dot_dimension_numbers<[1], [0], [0], [1], [0, 0, 1, 1], [], []>} : vector<16x16xf32>, vector<16x4xf32>, vector<16x4xf32> -> vector<16x4xf32>
    %c0_48 = arith.constant 0 : index
    %c0_49 = arith.constant 0 : index
    %65 = vector.load %arg9[%c0_48, %c0_49] : memref<1x4xf32, #tpu.memory_space<vmem>>, vector<1x4xf32>
    %66 = vector.broadcast %65 : vector<1x4xf32> to vector<16x4xf32>
    %67 = arith.addf %64, %66 : vector<16x4xf32>
    %cst_50 = arith.constant 0.000000e+00 : f32
    %68 = vector.broadcast %cst_50 : f32 to vector<16x4xf32>
    %69 = arith.maximumf %67, %68 : vector<16x4xf32>
    %c0_51 = arith.constant 0 : index
    %c0_52 = arith.constant 0 : index
    %70 = vector.load %arg12[%c0_51, %c0_52] : memref<16x4xf32, #tpu.memory_space<vmem>>, vector<16x4xf32>
    tpu.vector_store %arg12[%c0_51, %c0_52], %69 {strides = array<i32>} : memref<16x4xf32, #tpu.memory_space<vmem>>, vector<16x4xf32>,
    %c0_53 = arith.constant 0 : index
    %c0_54 = arith.constant 0 : index
    %71 = vector.load %arg12[%c0_53, %c0_54] : memref<16x4xf32, #tpu.memory_space<vmem>>, vector<8x4xf32>
    %c0_55 = arith.constant 0 : index
    %c0_56 = arith.constant 0 : index
    %c0_57 = arith.constant 0 : index
    %72 = vector.load %arg10[%c0_55, %c0_56, %c0_57] : memref<2x8x4xf32, #tpu.memory_space<vmem>>, vector<1x8x4xf32>
    %73 = vector.shape_cast %72 : vector<1x8x4xf32> to vector<8x4xf32>
    %74 = vector.shape_cast %71 : vector<8x4xf32> to vector<1x8x4xf32>
    tpu.vector_store %arg10[%c0_55, %c0_56, %c0_57], %74 {strides = array<i32>} : memref<2x8x4xf32, #tpu.memory_space<vmem>>, vector<1x8x4xf32>,
    %c8_58 = arith.constant 8 : index
    %c0_59 = arith.constant 0 : index
    %75 = vector.load %arg12[%c8_58, %c0_59] : memref<16x4xf32, #tpu.memory_space<vmem>>, vector<8x4xf32>
    %c1_60 = arith.constant 1 : index
    %c0_61 = arith.constant 0 : index
    %c0_62 = arith.constant 0 : index
    %76 = vector.load %arg10[%c1_60, %c0_61, %c0_62] : memref<2x8x4xf32, #tpu.memory_space<vmem>>, vector<1x8x4xf32>
    %77 = vector.shape_cast %76 : vector<1x8x4xf32> to vector<8x4xf32>
    %78 = vector.shape_cast %75 : vector<8x4xf32> to vector<1x8x4xf32>
    tpu.vector_store %arg10[%c1_60, %c0_61, %c0_62], %78 {strides = array<i32>} : memref<2x8x4xf32, #tpu.memory_space<vmem>>, vector<1x8x4xf32>,
    return
  }
  func.func @transform_0(%arg0: i32) -> (i32, i32, i32) {
    %c0_i32 = arith.constant 0 : i32
    %c0_i32_0 = arith.constant 0 : i32
    %c0_i32_1 = arith.constant 0 : i32
    return %arg0, %c0_i32, %c0_i32_0 : i32, i32, i32
  }
  func.func @transform_1(%arg0: i32) -> (i32, i32, i32) {
    %c0_i32 = arith.constant 0 : i32
    %c0_i32_0 = arith.constant 0 : i32
    %c0_i32_1 = arith.constant 0 : i32
    return %arg0, %c0_i32, %c0_i32_0 : i32, i32, i32
  }
  func.func @transform_2(%arg0: i32) -> (i32, i32, i32) {
    %c0_i32 = arith.constant 0 : i32
    %c0_i32_0 = arith.constant 0 : i32
    %c0_i32_1 = arith.constant 0 : i32
    return %arg0, %c0_i32, %c0_i32_0 : i32, i32, i32
  }
  func.func @transform_3(%arg0: i32) -> (i32, i32) {
    %c0_i32 = arith.constant 0 : i32
    %c0_i32_0 = arith.constant 0 : i32
    %c0_i32_1 = arith.constant 0 : i32
    return %c0_i32, %c0_i32_0 : i32, i32
  }
  func.func @transform_4(%arg0: i32) -> (i32, i32) {
    %c0_i32 = arith.constant 0 : i32
    %c0_i32_0 = arith.constant 0 : i32
    %c0_i32_1 = arith.constant 0 : i32
    return %c0_i32, %c0_i32_0 : i32, i32
  }
  func.func @transform_5(%arg0: i32) -> (i32, i32) {
    %c0_i32 = arith.constant 0 : i32
    %c0_i32_0 = arith.constant 0 : i32
    %c0_i32_1 = arith.constant 0 : i32
    return %c0_i32, %c0_i32_0 : i32, i32
  }
  func.func @transform_6(%arg0: i32) -> (i32, i32) {
    %c0_i32 = arith.constant 0 : i32
    %c0_i32_0 = arith.constant 0 : i32
    %c0_i32_1 = arith.constant 0 : i32
    return %c0_i32, %c0_i32_0 : i32, i32
  }
  func.func @transform_7(%arg0: i32) -> (i32, i32) {
    %c0_i32 = arith.constant 0 : i32
    %c0_i32_0 = arith.constant 0 : i32
    %c0_i32_1 = arith.constant 0 : i32
    return %c0_i32, %c0_i32_0 : i32, i32
  }
  func.func @transform_8(%arg0: i32) -> (i32, i32) {
    %c0_i32 = arith.constant 0 : i32
    %c0_i32_0 = arith.constant 0 : i32
    %c0_i32_1 = arith.constant 0 : i32
    return %c0_i32, %c0_i32_0 : i32, i32
  }
  func.func @transform_9(%arg0: i32) -> (i32, i32, i32) {
    %c0_i32 = arith.constant 0 : i32
    %c0_i32_0 = arith.constant 0 : i32
    %c0_i32_1 = arith.constant 0 : i32
    return %arg0, %c0_i32, %c0_i32_0 : i32, i32, i32
  }
}

</mosaic_0001>

<llo_original>
// kernel: stgat_block_forward.1
$region0: #{stgat_block_forward.1}
  #allocation0 [shape = 'u32[]', space=smem, size = 0x4, offset = 0x4, fixed_abs, tag = 'smem constant byte address 0x4 - core index']
  #allocation1 [shape = 'u32[144,128]{1,0:T(1,128)}', space=vmem, size = 0x12000, scoped, tag = 'internal scratch']
  #allocation2 [shape = 'f32[8,8]{1,0:T(8,128)}', space=vmem, size = 0x1000, scoped, tag = 'scratch operand']
  #allocation3 [shape = 'f32[16,4]{1,0:T(8,128)}', space=vmem, size = 0x2000, scoped, tag = 'scratch operand']
  %s0 = inlined_call_operand.vmem [shape: f32[2,8,4], index: 0, kind: input, shape index: {}]
  %s1 = inlined_call_operand.vmem [shape: bf16[1,8,8], index: 1, kind: input, shape index: {}]
  %s2 = inlined_call_operand.vmem [shape: f32[1,16,16], index: 2, kind: input, shape index: {}]
  %s3 = inlined_call_operand.vmem [shape: bf16[8,8], index: 3, kind: input, shape index: {}]
  %s4 = inlined_call_operand.vmem [shape: f32[1,8], index: 4, kind: input, shape index: {}]
  %s5 = inlined_call_operand.vmem [shape: f32[1,8], index: 5, kind: input, shape index: {}]
  %s6 = inlined_call_operand.vmem [shape: f32[1,8], index: 6, kind: input, shape index: {}]
  %s7 = inlined_call_operand.vmem [shape: bf16[4,4], index: 7, kind: input, shape index: {}]
  %s8 = inlined_call_operand.vmem [shape: f32[1,4], index: 8, kind: input, shape index: {}]
  %s9 = inlined_call_operand.vmem [shape: f32[2,8,4], index: 9, kind: output, shape index: {}]
  %s10 = sld [smem:[#allocation0]]
  $region46: #{stgat_block_forward.1} parent=0
    _
  %s12 = ssub.s32 1, %s10
  %s13 = scalar_select 0, %s12, %s10
  // Predicated region
  $region2: #{stgat_block_forward.1} parent=0 // pred_check
    _
  $region3: #{stgat_block_forward.1} parent=0 // pred_check_branch
    %15 = sbr.rel (0) target = $region5
  $region4: #{stgat_block_forward.1} parent=0 // pred_region
    _
  $region5: #{stgat_block_forward.1} parent=0 // pred_fallthru
    _
  // Predicated region
  $region6: #{stgat_block_forward.1} parent=0 // pred_check
    _
  $region7: #{stgat_block_forward.1} parent=0 // pred_check_branch
    %17 = sbr.rel (0) target = $region9
  $region8: #{stgat_block_forward.1} parent=0 // pred_region
    _
  $region9: #{stgat_block_forward.1} parent=0 // pred_fallthru
    _
  // Predicated region
  $region10: #{stgat_block_forward.1} parent=0 // pred_check
    _
  $region11: #{stgat_block_forward.1} parent=0 // pred_check_branch
    %19 = sbr.rel (0) target = $region13
  $region12: #{stgat_block_forward.1} parent=0 // pred_region
    _
  $region13: #{stgat_block_forward.1} parent=0 // pred_fallthru
    _
  // Predicated region
  $region14: #{stgat_block_forward.1} parent=0 // pred_check
    _
  $region15: #{stgat_block_forward.1} parent=0 // pred_check_branch
    %21 = sbr.rel (0) target = $region17
  $region16: #{stgat_block_forward.1} parent=0 // pred_region
    _
  $region17: #{stgat_block_forward.1} parent=0 // pred_fallthru
    _
  // Predicated region
  $region18: #{stgat_block_forward.1} parent=0 // pred_check
    _
  $region19: #{stgat_block_forward.1} parent=0 // pred_check_branch
    %23 = sbr.rel (0) target = $region21
  $region20: #{stgat_block_forward.1} parent=0 // pred_region
    _
  $region21: #{stgat_block_forward.1} parent=0 // pred_fallthru
    _
  // Predicated region
  $region22: #{stgat_block_forward.1} parent=0 // pred_check
    _
  $region23: #{stgat_block_forward.1} parent=0 // pred_check_branch
    %25 = sbr.rel (0) target = $region25
  $region24: #{stgat_block_forward.1} parent=0 // pred_region
    _
  $region25: #{stgat_block_forward.1} parent=0 // pred_fallthru
    _
  // Predicated region
  $region26: #{stgat_block_forward.1} parent=0 // pred_check
    _
  $region27: #{stgat_block_forward.1} parent=0 // pred_check_branch
    %27 = sbr.rel (0) target = $region29
  $region28: #{stgat_block_forward.1} parent=0 // pred_region
    _
  $region29: #{stgat_block_forward.1} parent=0 // pred_fallthru
    _
  // Predicated region
  $region30: #{stgat_block_forward.1} parent=0 // pred_check
    _
  $region31: #{stgat_block_forward.1} parent=0 // pred_check_branch
    %29 = sbr.rel (0) target = $region33
  $region32: #{stgat_block_forward.1} parent=0 // pred_region
    _
  $region33: #{stgat_block_forward.1} parent=0 // pred_fallthru
    _
  // Predicated region
  $region34: #{stgat_block_forward.1} parent=0 // pred_check
    _
  $region35: #{stgat_block_forward.1} parent=0 // pred_check_branch
    %31 = sbr.rel (0) target = $region37
  $region36: #{stgat_block_forward.1} parent=0 // pred_region
    _
  $region37: #{stgat_block_forward.1} parent=0 // pred_fallthru
    _
  %v35 = vld [vmem:[%s0] sm:$0xff]
  %36 = vxpose.xlu0.b32.start [1/16] %v35, 128
  %37 = vxpose.xlu0.b32.cont [2/16] 0.0, 128
  %38 = vxpose.xlu0.b32.cont [3/16] 0.0, 128
  %39 = vxpose.xlu0.b32.cont [4/16] 0.0, 128
  %40 = vxpose.xlu0.b32.cont [5/16] 0.0, 128
  %41 = vxpose.xlu0.b32.cont [6/16] 0.0, 128
  %42 = vxpose.xlu0.b32.cont [7/16] 0.0, 128
  %43 = vxpose.xlu0.b32.cont [8/16] 0.0, 128
  %44 = vxpose.xlu0.b32.cont [9/16] 0.0, 128
  %45 = vxpose.xlu0.b32.cont [10/16] 0.0, 128
  %46 = vxpose.xlu0.b32.cont [11/16] 0.0, 128
  %47 = vxpose.xlu0.b32.cont [12/16] 0.0, 128
  %48 = vxpose.xlu0.b32.cont [13/16] 0.0, 128
  %49 = vxpose.xlu0.b32.cont [14/16] 0.0, 128
  %50 = vxpose.xlu0.b32.cont [15/16] 0.0, 128
  %51 = vxpose.xlu0.b32.end [16/16] 0.0, 128
  %v52 = vpop.trf.xlu0
  %v53 = vpop.trf.xlu0
  %v54 = vpop.trf.xlu0
  %v55 = vpop.trf.xlu0
  %v56 = vpop.trf.xlu0
  %v57 = vpop.trf.xlu0
  %v58 = vpop.trf.xlu0
  %v59 = vpop.trf.xlu0
  %v60 = vpop.trf.xlu0
  %v61 = vpop.trf.xlu0
  %v62 = vpop.trf.xlu0
  %v63 = vpop.trf.xlu0
  %v64 = vpop.trf.xlu0
  %v65 = vpop.trf.xlu0
  %v66 = vpop.trf.xlu0
  %v67 = vpop.trf.xlu0
  %vm68 = vcmask 60416
  %69 = vst.msk [vmem:[#allocation2] sm:$0xf] %vm68, %v52
  %s70 = scalar_lea.vmem %s0, 8
  %v71 = vld [vmem:[%s70] sm:$0xff]
  %72 = vxpose.xlu0.b32.start [1/16] %v71, 128
  %73 = vxpose.xlu0.b32.cont [2/16] 0.0, 128
  %74 = vxpose.xlu0.b32.cont [3/16] 0.0, 128
  %75 = vxpose.xlu0.b32.cont [4/16] 0.0, 128
  %76 = vxpose.xlu0.b32.cont [5/16] 0.0, 128
  %77 = vxpose.xlu0.b32.cont [6/16] 0.0, 128
  %78 = vxpose.xlu0.b32.cont [7/16] 0.0, 128
  %79 = vxpose.xlu0.b32.cont [8/16] 0.0, 128
  %80 = vxpose.xlu0.b32.cont [9/16] 0.0, 128
  %81 = vxpose.xlu0.b32.cont [10/16] 0.0, 128
  %82 = vxpose.xlu0.b32.cont [11/16] 0.0, 128
  %83 = vxpose.xlu0.b32.cont [12/16] 0.0, 128
  %84 = vxpose.xlu0.b32.cont [13/16] 0.0, 128
  %85 = vxpose.xlu0.b32.cont [14/16] 0.0, 128
  %86 = vxpose.xlu0.b32.cont [15/16] 0.0, 128
  %87 = vxpose.xlu0.b32.end [16/16] 0.0, 128
  %v88 = vpop.trf.xlu0
  %v89 = vpop.trf.xlu0
  %v90 = vpop.trf.xlu0
  %v91 = vpop.trf.xlu0
  %v92 = vpop.trf.xlu0
  %v93 = vpop.trf.xlu0
  %v94 = vpop.trf.xlu0
  %v95 = vpop.trf.xlu0
  %v96 = vpop.trf.xlu0
  %v97 = vpop.trf.xlu0
  %v98 = vpop.trf.xlu0
  %v99 = vpop.trf.xlu0
  %v100 = vpop.trf.xlu0
  %v101 = vpop.trf.xlu0
  %v102 = vpop.trf.xlu0
  %v103 = vpop.trf.xlu0
  %104 = vst.msk [vmem:[#allocation2 + $0x4] sm:$0xf] %vm68, %v88
  %v105 = vld [vmem:[#allocation2] sm:$0xff]
  %v106 = vpack.c.bf16 %v105, %v105
  %v107 = vld [vmem:[%s3] sm:$0xf]
  %vm108 = vcmask 64512
  %v110 = vsel %vm108, %v106, 0
  %vm112 = vcmask 1043456
  %v114 = vsel %vm112, %v107, 0
  %116 = vmatprep.subr.bf16.mxu0 0
  %117 = vmatpush1.bf16.msra.mxu0 %v114
  %118 = vmatprep.subr.bf16.mxu0 0
  %119 = vmatpush1.bf16.msra.mxu0 0
  %120 = vmatprep.subr.bf16.mxu0 0
  %121 = vmatpush1.bf16.msra.mxu0 0
  %122 = vmatprep.subr.bf16.mxu0 0
  %123 = vmatpush1.bf16.msra.mxu0 0
  %124 = vmatprep.subr.bf16.mxu0 0
  %125 = vmatpush1.bf16.msra.mxu0 0
  %126 = vmatprep.subr.bf16.mxu0 0
  %127 = vmatpush1.bf16.msra.mxu0 0
  %128 = vmatprep.subr.bf16.mxu0 0
  %129 = vmatpush1.bf16.msra.mxu0 0
  %130 = vmatprep.subr.bf16.mxu0 0
  %131 = vmatpush1.bf16.msra.mxu0 0
  %132 = vmatprep.subr.bf16.mxu0 0
  %133 = vmatpush1.bf16.msra.mxu0 0
  %134 = vmatprep.subr.bf16.mxu0 0
  %135 = vmatpush1.bf16.msra.mxu0 0
  %136 = vmatprep.subr.bf16.mxu0 0
  %137 = vmatpush1.bf16.msra.mxu0 0
  %138 = vmatprep.subr.bf16.mxu0 0
  %139 = vmatpush1.bf16.msra.mxu0 0
  %140 = vmatprep.subr.bf16.mxu0 0
  %141 = vmatpush1.bf16.msra.mxu0 0
  %142 = vmatprep.subr.bf16.mxu0 0
  %143 = vmatpush1.bf16.msra.mxu0 0
  %144 = vmatprep.subr.bf16.mxu0 0
  %145 = vmatpush1.bf16.msra.mxu0 0
  %146 = vmatprep.subr.bf16.mxu0 0
  %147 = vmatpush1.bf16.msra.mxu0 0
  %148 = vmatprep.mubr.bf16.mxu0 0
  %149 = vmatmul.mubr.bf16.gmra.mrb[0].mxu0 %v110
  %v150 = vpop.f32.mrb[0].mxu0
  %v151 = vadd.f32 0.0, %v150
  %v152 = vpop.f32.mrb[0].mxu0
  %v153 = vpop.f32.mrb[0].mxu0
  %v154 = vpop.f32.mrb[0].mxu0
  %155 = vdwg.mxu0
  %v156 = vpack.c.bf16 %v151, %v151
  %v157 = vld [vmem:[%s5] sm:$0x1]
  %v159 = vlaneseq
  %v160 = vshrl.u32 %v159, 7
  %v161 = vsub.s32 0, %v160
  %v162 = vrot.slane %v157, %v161
  %v164 = vmul.f32 %v151, %v162
  %v165 = vsel %vm108, %v164, 0.0
  %166 = vadd.xlane.f32.xlu0 %v165
  %v167 = vpop.xlane.xlu0 %166
  %v168 = vld [vmem:[%s4] sm:$0x1]
  %v170 = vsel %vm108, %v168, 0
  %v173 = vsel %vm108, %v151, 0
  %175 = vmatprep.subr.mxu0 0.0
  %176 = vmatpush1.xpose.msra.mxu0 %v173
  %177 = vmatprep.subr.mxu0 0.0
  %178 = vmatpush1.xpose.msra.mxu0 0.0
  %179 = vmatprep.subr.mxu0 0.0
  %180 = vmatpush1.xpose.msra.mxu0 0.0
  %181 = vmatprep.subr.mxu0 0.0
  %182 = vmatpush1.xpose.msra.mxu0 0.0
  %183 = vmatprep.subr.mxu0 0.0
  %184 = vmatpush1.xpose.msra.mxu0 0.0
  %185 = vmatprep.subr.mxu0 0.0
  %186 = vmatpush1.xpose.msra.mxu0 0.0
  %187 = vmatprep.subr.mxu0 0.0
  %188 = vmatpush1.xpose.msra.mxu0 0.0
  %189 = vmatprep.subr.mxu0 0.0
  %190 = vmatpush1.xpose.msra.mxu0 0.0
  %191 = vmatprep.subr.mxu0 0.0
  %192 = vmatpush1.xpose.msra.mxu0 0.0
  %193 = vmatprep.subr.mxu0 0.0
  %194 = vmatpush1.xpose.msra.mxu0 0.0
  %195 = vmatprep.subr.mxu0 0.0
  %196 = vmatpush1.xpose.msra.mxu0 0.0
  %197 = vmatprep.subr.mxu0 0.0
  %198 = vmatpush1.xpose.msra.mxu0 0.0
  %199 = vmatprep.subr.mxu0 0.0
  %200 = vmatpush1.xpose.msra.mxu0 0.0
  %201 = vmatprep.subr.mxu0 0.0
  %202 = vmatpush1.xpose.msra.mxu0 0.0
  %203 = vmatprep.subr.mxu0 0.0
  %204 = vmatpush1.xpose.msra.mxu0 0.0
  %205 = vmatprep.subr.mxu0 0.0
  %206 = vmatpush1.xpose.msra.mxu0 0.0
  %207 = vmatprep.subr.mxu0 0.0
  %208 = vmatpush1.xpose.msra.mxu0 0.0
  %209 = vmatprep.subr.mxu0 0.0
  %210 = vmatpush1.xpose.msra.mxu0 0.0
  %211 = vmatprep.subr.mxu0 0.0
  %212 = vmatpush1.xpose.msra.mxu0 0.0
  %213 = vmatprep.subr.mxu0 0.0
  %214 = vmatpush1.xpose.msra.mxu0 0.0
  %215 = vmatprep.subr.mxu0 0.0
  %216 = vmatpush1.xpose.msra.mxu0 0.0
  %217 = vmatprep.subr.mxu0 0.0
  %218 = vmatpush1.xpose.msra.mxu0 0.0
  %219 = vmatprep.subr.mxu0 0.0
  %220 = vmatpush1.xpose.msra.mxu0 0.0
  %221 = vmatprep.subr.mxu0 0.0
  %222 = vmatpush1.xpose.msra.mxu0 0.0
  %223 = vmatprep.subr.mxu0 0.0
  %224 = vmatpush1.xpose.msra.mxu0 0.0
  %225 = vmatprep.subr.mxu0 0.0
  %226 = vmatpush1.xpose.msra.mxu0 0.0
  %227 = vmatprep.subr.mxu0 0.0
  %228 = vmatpush1.xpose.msra.mxu0 0.0
  %229 = vmatprep.subr.mxu0 0.0
  %230 = vmatpush1.xpose.msra.mxu0 0.0
  %231 = vmatprep.subr.mxu0 0.0
  %232 = vmatpush1.xpose.msra.mxu0 0.0
  %233 = vmatprep.subr.mxu0 0.0
  %234 = vmatpush1.xpose.msra.mxu0 0.0
  %235 = vmatprep.subr.mxu0 0.0
  %236 = vmatpush1.xpose.msra.mxu0 0.0
  %237 = vmatprep.subr.mxu0 0.0
  %238 = vmatpush1.xpose.msra.mxu0 0.0
  %239 = vmatprep.mubr.f32.mxu0 0.0
  %240 = vmatmul.mubr.f32.gmra.mrb[0].mxu0 %v170
  %v241 = vpop.f32.mrb[0].mxu0
  %v242 = vadd.f32 0.0, %v241
  %v243 = vpop.f32.mrb[0].mxu0
  %244 = vdwg.mxu0
  %v245 = vlaneseq
  %v246 = vshrl.u32 %v245, 7
  %v247 = vsub.s32 0, %v246
  %v248 = vrot.slane %v242, %v247
  %v249 = vadd.f32 %v167, %v248
  %vm250 = vcmp.gt.f32.partialorder %v249, 0.0
  %v251 = vmul.f32 %v249, 0.2
  %v252 = vsel %vm250, %v249, %v251
  %v253 = vld [vmem:[%s1] sm:$0xf]
  %vm254 = vcmp.gt.bf16.partialorder %v253, 0
  %v255 = vsel %vm254, 65537, 0
  %v256 = vunpack.c.l.b16 %v255
  %vm257 = vcmp.ne.s32.totalorder %v256, 0
  %v258 = vsel %vm257, %v252, -1e+30
  %v259 = vsel %vm108, %v258, -inf
  %260 = vmax.xlane.f32.xlu0 %v259
  %v261 = vpop.xlane.xlu0 %260
  %v262 = vsub.f32 %v258, %v261
  %v263 = vmul.f32 %v262, 1.442695
  %v264 = vpow.pop %v263
  %v265 = vsel %vm108, %v264, 0.0
  %266 = vadd.xlane.f32.xlu0 %v265
  %v267 = vpop.xlane.xlu0 %266
  %v268 = vrcp.pop %v267
  %v269 = vpack.c.bf16 %v264, %v264
  %v271 = vsel %vm108, %v269, 0
  %v274 = vsel %vm112, %v156, 0
  %276 = vmatprep.subr.bf16.mxu0 0
  %277 = vmatpush1.bf16.msra.mxu0 %v274
  %278 = vmatprep.subr.bf16.mxu0 0
  %279 = vmatpush1.bf16.msra.mxu0 0
  %280 = vmatprep.subr.bf16.mxu0 0
  %281 = vmatpush1.bf16.msra.mxu0 0
  %282 = vmatprep.subr.bf16.mxu0 0
  %283 = vmatpush1.bf16.msra.mxu0 0
  %284 = vmatprep.subr.bf16.mxu0 0
  %285 = vmatpush1.bf16.msra.mxu0 0
  %286 = vmatprep.subr.bf16.mxu0 0
  %287 = vmatpush1.bf16.msra.mxu0 0
  %288 = vmatprep.subr.bf16.mxu0 0
  %289 = vmatpush1.bf16.msra.mxu0 0
  %290 = vmatprep.subr.bf16.mxu0 0
  %291 = vmatpush1.bf16.msra.mxu0 0
  %292 = vmatprep.subr.bf16.mxu0 0
  %293 = vmatpush1.bf16.msra.mxu0 0
  %294 = vmatprep.subr.bf16.mxu0 0
  %295 = vmatpush1.bf16.msra.mxu0 0
  %296 = vmatprep.subr.bf16.mxu0 0
  %297 = vmatpush1.bf16.msra.mxu0 0
  %298 = vmatprep.subr.bf16.mxu0 0
  %299 = vmatpush1.bf16.msra.mxu0 0
  %300 = vmatprep.subr.bf16.mxu0 0
  %301 = vmatpush1.bf16.msra.mxu0 0
  %302 = vmatprep.subr.bf16.mxu0 0
  %303 = vmatpush1.bf16.msra.mxu0 0
  %304 = vmatprep.subr.bf16.mxu0 0
  %305 = vmatpush1.bf16.msra.mxu0 0
  %306 = vmatprep.subr.bf16.mxu0 0
  %307 = vmatpush1.bf16.msra.mxu0 0
  %308 = vmatprep.mubr.bf16.mxu0 0
  %309 = vmatmul.mubr.bf16.gmra.mrb[0].mxu0 %v271
  %v310 = vpop.f32.mrb[0].mxu0
  %v311 = vadd.f32 0.0, %v310
  %v312 = vpop.f32.mrb[0].mxu0
  %v313 = vpop.f32.mrb[0].mxu0
  %v314 = vpop.f32.mrb[0].mxu0
  %315 = vdwg.mxu0
  %v316 = vmul.f32 %v311, %v268
  %v317 = vld [vmem:[%s6] sm:$0x1]
  %v319 = vlaneseq
  %v320 = vshrl.u32 %v319, 7
  %v321 = vsub.s32 0, %v320
  %v322 = vrot.slane %v317, %v321
  %v324 = vadd.f32 %v316, %v322
  %v325 = vmax.f32 %v324, 0.0
  %326 = vst.msk [vmem:[#allocation2] sm:$0xff] %vm108, %v325
  %v327 = vld [vmem:[#allocation2] sm:$0xf]
  %328 = vxpose.xlu0.b32.start [1/16] %v327, 128
  %329 = vxpose.xlu0.b32.cont [2/16] 0.0, 128
  %330 = vxpose.xlu0.b32.cont [3/16] 0.0, 128
  %331 = vxpose.xlu0.b32.cont [4/16] 0.0, 128
  %332 = vxpose.xlu0.b32.cont [5/16] 0.0, 128
  %333 = vxpose.xlu0.b32.cont [6/16] 0.0, 128
  %334 = vxpose.xlu0.b32.cont [7/16] 0.0, 128
  %335 = vxpose.xlu0.b32.cont [8/16] 0.0, 128
  %336 = vxpose.xlu0.b32.cont [9/16] 0.0, 128
  %337 = vxpose.xlu0.b32.cont [10/16] 0.0, 128
  %338 = vxpose.xlu0.b32.cont [11/16] 0.0, 128
  %339 = vxpose.xlu0.b32.cont [12/16] 0.0, 128
  %340 = vxpose.xlu0.b32.cont [13/16] 0.0, 128
  %341 = vxpose.xlu0.b32.cont [14/16] 0.0, 128
  %342 = vxpose.xlu0.b32.cont [15/16] 0.0, 128
  %343 = vxpose.xlu0.b32.end [16/16] 0.0, 128
  %v344 = vpop.trf.xlu0
  %v345 = vpop.trf.xlu0
  %v346 = vpop.trf.xlu0
  %v347 = vpop.trf.xlu0
  %v348 = vpop.trf.xlu0
  %v349 = vpop.trf.xlu0
  %v350 = vpop.trf.xlu0
  %v351 = vpop.trf.xlu0
  %v352 = vpop.trf.xlu0
  %v353 = vpop.trf.xlu0
  %v354 = vpop.trf.xlu0
  %v355 = vpop.trf.xlu0
  %v356 = vpop.trf.xlu0
  %v357 = vpop.trf.xlu0
  %v358 = vpop.trf.xlu0
  %v359 = vpop.trf.xlu0
  %vm360 = vcmask 31744
  %361 = vst.msk [vmem:[#allocation3] sm:$0xff] %vm360, %v344
  %v362 = vld [vmem:[#allocation2 + $0x4] sm:$0xf]
  %363 = vxpose.xlu0.b32.start [1/16] %v362, 128
  %364 = vxpose.xlu0.b32.cont [2/16] 0.0, 128
  %365 = vxpose.xlu0.b32.cont [3/16] 0.0, 128
  %366 = vxpose.xlu0.b32.cont [4/16] 0.0, 128
  %367 = vxpose.xlu0.b32.cont [5/16] 0.0, 128
  %368 = vxpose.xlu0.b32.cont [6/16] 0.0, 128
  %369 = vxpose.xlu0.b32.cont [7/16] 0.0, 128
  %370 = vxpose.xlu0.b32.cont [8/16] 0.0, 128
  %371 = vxpose.xlu0.b32.cont [9/16] 0.0, 128
  %372 = vxpose.xlu0.b32.cont [10/16] 0.0, 128
  %373 = vxpose.xlu0.b32.cont [11/16] 0.0, 128
  %374 = vxpose.xlu0.b32.cont [12/16] 0.0, 128
  %375 = vxpose.xlu0.b32.cont [13/16] 0.0, 128
  %376 = vxpose.xlu0.b32.cont [14/16] 0.0, 128
  %377 = vxpose.xlu0.b32.cont [15/16] 0.0, 128
  %378 = vxpose.xlu0.b32.end [16/16] 0.0, 128
  %v379 = vpop.trf.xlu0
  %v380 = vpop.trf.xlu0
  %v381 = vpop.trf.xlu0
  %v382 = vpop.trf.xlu0
  %v383 = vpop.trf.xlu0
  %v384 = vpop.trf.xlu0
  %v385 = vpop.trf.xlu0
  %v386 = vpop.trf.xlu0
  %v387 = vpop.trf.xlu0
  %v388 = vpop.trf.xlu0
  %v389 = vpop.trf.xlu0
  %v390 = vpop.trf.xlu0
  %v391 = vpop.trf.xlu0
  %v392 = vpop.trf.xlu0
  %v393 = vpop.trf.xlu0
  %v394 = vpop.trf.xlu0
  %395 = vst.msk [vmem:[#allocation3 + $0x8] sm:$0xff] %vm360, %v379
  %v396 = vld [vmem:[#allocation3] sm:$0xff]
  %v397 = vld [vmem:[#allocation3 + $0x8] sm:$0xff]
  %v398 = vpack.c.bf16 %v397, %v396
  %v399 = vld [vmem:[%s7] sm:$0x3]
  %v401 = vsel %vm360, %v398, 0
  %vm403 = vcmask 1041408
  %v405 = vsel %vm403, %v399, 0
  %407 = vmatprep.subr.bf16.mxu0 0
  %408 = vmatpush1.bf16.msra.mxu0 %v405
  %409 = vmatprep.subr.bf16.mxu0 0
  %410 = vmatpush1.bf16.msra.mxu0 0
  %411 = vmatprep.subr.bf16.mxu0 0
  %412 = vmatpush1.bf16.msra.mxu0 0
  %413 = vmatprep.subr.bf16.mxu0 0
  %414 = vmatpush1.bf16.msra.mxu0 0
  %415 = vmatprep.subr.bf16.mxu0 0
  %416 = vmatpush1.bf16.msra.mxu0 0
  %417 = vmatprep.subr.bf16.mxu0 0
  %418 = vmatpush1.bf16.msra.mxu0 0
  %419 = vmatprep.subr.bf16.mxu0 0
  %420 = vmatpush1.bf16.msra.mxu0 0
  %421 = vmatprep.subr.bf16.mxu0 0
  %422 = vmatpush1.bf16.msra.mxu0 0
  %423 = vmatprep.subr.bf16.mxu0 0
  %424 = vmatpush1.bf16.msra.mxu0 0
  %425 = vmatprep.subr.bf16.mxu0 0
  %426 = vmatpush1.bf16.msra.mxu0 0
  %427 = vmatprep.subr.bf16.mxu0 0
  %428 = vmatpush1.bf16.msra.mxu0 0
  %429 = vmatprep.subr.bf16.mxu0 0
  %430 = vmatpush1.bf16.msra.mxu0 0
  %431 = vmatprep.subr.bf16.mxu0 0
  %432 = vmatpush1.bf16.msra.mxu0 0
  %433 = vmatprep.subr.bf16.mxu0 0
  %434 = vmatpush1.bf16.msra.mxu0 0
  %435 = vmatprep.subr.bf16.mxu0 0
  %436 = vmatpush1.bf16.msra.mxu0 0
  %437 = vmatprep.subr.bf16.mxu0 0
  %438 = vmatpush1.bf16.msra.mxu0 0
  %439 = vmatprep.mubr.bf16.mxu0 0
  %440 = vmatmul.mubr.bf16.gmra.mrb[0].mxu0 %v401
  %v441 = vpop.f32.mrb[0].mxu0
  %v442 = vadd.f32 0.0, %v441
  %v443 = vpop.f32.mrb[0].mxu0
  %v444 = vpop.f32.mrb[0].mxu0
  %v445 = vadd.f32 0.0, %v444
  %v446 = vpop.f32.mrb[0].mxu0
  %447 = vdwg.mxu0
  %v448 = vld [vmem:[%s2] sm:$0xff]
  %v449 = vld [vmem:[%s2 + $0x8] sm:$0xff]
  %v450 = vld [vmem:[%s8] sm:$0x1]
  %v452 = vlaneseq
  %v453 = vshrl.u32 %v452, 7
  %v454 = vsub.s32 0, %v453
  %v455 = vrot.slane %v450, %v454
  %vm457 = vcmask 130048
  %v459 = vsel %vm457, %v448, 0
  %v462 = vsel %vm457, %v449, 0
  %464 = vmatprep.subr.mxu0 0.0
  %465 = vmatpush1.msra.mxu0 %v442
  %466 = vmatprep.subr.mxu0 0.0
  %467 = vmatpush1.msra.mxu0 %v445
  %468 = vmatprep.subr.mxu0 0.0
  %469 = vmatpush1.msra.mxu0 0.0
  %470 = vmatprep.subr.mxu0 0.0
  %471 = vmatpush1.msra.mxu0 0.0
  %472 = vmatprep.subr.mxu0 0.0
  %473 = vmatpush1.msra.mxu0 0.0
  %474 = vmatprep.subr.mxu0 0.0
  %475 = vmatpush1.msra.mxu0 0.0
  %476 = vmatprep.subr.mxu0 0.0
  %477 = vmatpush1.msra.mxu0 0.0
  %478 = vmatprep.subr.mxu0 0.0
  %479 = vmatpush1.msra.mxu0 0.0
  %480 = vmatprep.subr.mxu0 0.0
  %481 = vmatpush1.msra.mxu0 0.0
  %482 = vmatprep.subr.mxu0 0.0
  %483 = vmatpush1.msra.mxu0 0.0
  %484 = vmatprep.subr.mxu0 0.0
  %485 = vmatpush1.msra.mxu0 0.0
  %486 = vmatprep.subr.mxu0 0.0
  %487 = vmatpush1.msra.mxu0 0.0
  %488 = vmatprep.subr.mxu0 0.0
  %489 = vmatpush1.msra.mxu0 0.0
  %490 = vmatprep.subr.mxu0 0.0
  %491 = vmatpush1.msra.mxu0 0.0
  %492 = vmatprep.subr.mxu0 0.0
  %493 = vmatpush1.msra.mxu0 0.0
  %494 = vmatprep.subr.mxu0 0.0
  %495 = vmatpush1.msra.mxu0 0.0
  %496 = vmatprep.subr.mxu0 0.0
  %497 = vmatpush1.msra.mxu0 0.0
  %498 = vmatprep.subr.mxu0 0.0
  %499 = vmatpush1.msra.mxu0 0.0
  %500 = vmatprep.subr.mxu0 0.0
  %501 = vmatpush1.msra.mxu0 0.0
  %502 = vmatprep.subr.mxu0 0.0
  %503 = vmatpush1.msra.mxu0 0.0
  %504 = vmatprep.subr.mxu0 0.0
  %505 = vmatpush1.msra.mxu0 0.0
  %506 = vmatprep.subr.mxu0 0.0
  %507 = vmatpush1.msra.mxu0 0.0
  %508 = vmatprep.subr.mxu0 0.0
  %509 = vmatpush1.msra.mxu0 0.0
  %510 = vmatprep.subr.mxu0 0.0
  %511 = vmatpush1.msra.mxu0 0.0
  %512 = vmatprep.subr.mxu0 0.0
  %513 = vmatpush1.msra.mxu0 0.0
  %514 = vmatprep.subr.mxu0 0.0
  %515 = vmatpush1.msra.mxu0 0.0
  %516 = vmatprep.subr.mxu0 0.0
  %517 = vmatpush1.msra.mxu0 0.0
  %518 = vmatprep.subr.mxu0 0.0
  %519 = vmatpush1.msra.mxu0 0.0
  %520 = vmatprep.subr.mxu0 0.0
  %521 = vmatpush1.msra.mxu0 0.0
  %522 = vmatprep.subr.mxu0 0.0
  %523 = vmatpush1.msra.mxu0 0.0
  %524 = vmatprep.subr.mxu0 0.0
  %525 = vmatpush1.msra.mxu0 0.0
  %526 = vmatprep.subr.mxu0 0.0
  %527 = vmatpush1.msra.mxu0 0.0
  %528 = vmatprep.mubr.f32.mxu0 0.0
  %529 = vmatmul.mubr.f32.gmra.mrb[0].mxu0 %v459
  %v530 = vpop.f32.mrb[0].mxu0
  %v531 = vadd.f32 %v455, %v530
  %v532 = vpop.f32.mrb[0].mxu0
  %533 = vmatprep.mubr.f32.mxu0 0.0
  %534 = vmatmul.mubr.f32.gmra.mrb[0].mxu0 %v462
  %v535 = vpop.f32.mrb[0].mxu0
  %v536 = vadd.f32 %v455, %v535
  %v537 = vpop.f32.mrb[0].mxu0
  %538 = vdwg.mxu0
  %v539 = vmax.f32 %v531, 0.0
  %v540 = vmax.f32 %v536, 0.0
  %541 = vst.msk [vmem:[#allocation3] sm:$0xff] %vm360, %v539
  %542 = vst.msk [vmem:[#allocation3 + $0x8] sm:$0xff] %vm360, %v540
  %v543 = vld [vmem:[#allocation3] sm:$0xff]
  %544 = vst.msk [vmem:[%s9] sm:$0xff] %vm360, %v543
  %v545 = vld [vmem:[#allocation3 + $0x8] sm:$0xff]
  %s546 = scalar_lea.vmem %s9, 8
  %547 = vst.msk [vmem:[%s546] sm:$0xff] %vm360, %v545
  // Predicated region
  $region38: #{stgat_block_forward.1} parent=0 // pred_check
    _
  $region39: #{stgat_block_forward.1} parent=0 // pred_check_branch
    %549 = sbr.rel (0) target = $region41
  $region40: #{stgat_block_forward.1} parent=0 // pred_region
    _
  $region41: #{stgat_block_forward.1} parent=0 // pred_fallthru
    _
  // Predicated region
  $region42: #{stgat_block_forward.1} parent=0 // pred_check
    _
  $region43: #{stgat_block_forward.1} parent=0 // pred_check_branch
    %551 = sbr.rel (0) target = $region45
  $region44: #{stgat_block_forward.1} parent=0 // pred_region
    _
  $region45: #{stgat_block_forward.1} parent=0 // pred_fallthru
    _

</llo_original>
